<compile_context>
chip_gen: v7x
topology: tpu7x:2x2x1
jax: 0.10.0
libtpu: 0.0.40
codegen_flags: <defaults>
</compile_context>

<pallas_src>
import functools

import jax
import jax.numpy as jnp
from jax.experimental import pallas as pl
from jax.experimental.pallas import tpu as pltpu


def _se_kernel(x_ref, w1_ref, w2_ref, o_ref, *, inv_hw):
    # x_ref block: (Bt, C, HWp); any spatial padding is zeros.
    x = x_ref[...].astype(jnp.float32)

    # Squeeze: global average pool over the (padded) spatial axis. Zeros in the
    # padding do not perturb the sum; divide by the true H*W.
    pooled = jnp.sum(x, axis=-1) * inv_hw                        # (Bt, C)

    # Excitation on the VPU (output width per dot is tiny -> MXU would idle and
    # only add result-FIFO latency to every grid step).
    w1 = w1_ref[...].astype(jnp.float32)                         # (hidden, C)
    w2 = w2_ref[...].astype(jnp.float32)                         # (C, hidden)
    h = jnp.sum(pooled[:, None, :] * w1[None, :, :], axis=-1)    # (Bt, hidden)
    h = jnp.maximum(h, 0.0)
    s = jnp.sum(h[:, None, :] * w2[None, :, :], axis=-1)         # (Bt, C)
    s = jax.nn.sigmoid(s)

    # Scale: broadcast the channel gates over the spatial axis.
    o_ref[...] = (x * s[:, :, None]).astype(o_ref.dtype)


def _pick_batch_tile(batch, per_batch_bytes, *, target_bytes=2 << 20):
    """Largest divisor of `batch` whose block stays <= target_bytes, preferring
    to keep >=2 grid steps (dual-TensorCore chips) once blocks exceed ~512 KiB."""
    best = 1
    for d in range(1, batch + 1):
        if batch % d:
            continue
        if d * per_batch_bytes > target_bytes:
            break
        if batch // d < 2 and best * per_batch_bytes >= (512 << 10):
            break
        best = d
    return best


def se_layer(x_nchw, w1, w2):
    """x_nchw: (B, C, H, W); w1: (hidden, C) = fc1 weight; w2: (C, hidden) = fc2 weight."""
    B, C, H, W = x_nchw.shape
    HW = H * W
    hidden = w1.shape[0]
    x_itemsize = jnp.dtype(x_nchw.dtype).itemsize

    # Lane-dense minor dim: pad HW up to a multiple of 128.
    HWp = ((HW + 127) // 128) * 128
    x_flat = x_nchw.reshape(B, C, HW)
    if HWp != HW:
        x_flat = jnp.pad(x_flat, ((0, 0), (0, 0), (0, HWp - HW)))

    per_batch_bytes = C * HWp * x_itemsize
    Bt = _pick_batch_tile(B, per_batch_bytes)
    # TODO(synk): for very large C*HW (per-batch slab beyond the v7x 64 MiB VMEM
    # budget) switch to a two-pass spatially-tiled variant (accumulate the pooled
    # (C,) vector across HW tiles, compute gates at the last tile, rescale in a
    # second sweep).

    block_bytes = Bt * per_batch_bytes
    w_bytes = (w1.size + w2.size) * jnp.dtype(w1.dtype).itemsize
    # Input and output blocks are each double-buffered by the pipeline.
    vmem_limit = int(4 * block_bytes + 2 * w_bytes + (4 << 20))
    vmem_limit = max(16 << 20, min(vmem_limit, 64 << 20))  # 64 MiB = v7x physical VMEM

    kernel = functools.partial(_se_kernel, inv_hw=1.0 / float(HW))

    out_flat = pl.pallas_call(
        kernel,
        out_shape=jax.ShapeDtypeStruct((B, C, HWp), x_nchw.dtype),
        grid_spec=pltpu.PrefetchScalarGridSpec(
            num_scalar_prefetch=0,
            grid=(B // Bt,),
            in_specs=[
                pl.BlockSpec((Bt, C, HWp), lambda b: (b, 0, 0)),
                pl.BlockSpec((hidden, C), lambda b: (0, 0)),
                pl.BlockSpec((C, hidden), lambda b: (0, 0)),
            ],
            out_specs=pl.BlockSpec((Bt, C, HWp), lambda b: (b, 0, 0)),
        ),
        compiler_params=pltpu.CompilerParams(
            dimension_semantics=("parallel",),
            vmem_limit_bytes=vmem_limit,
        ),
    )(x_flat, w1, w2)

    return out_flat[:, :, :HW].reshape(B, C, H, W)


def _reference(x, w1, w2):
    y = jnp.mean(x, axis=(2, 3))                 # (B, C)
    y = jnp.maximum(y @ w1.T, 0.0)               # (B, hidden)
    y = jax.nn.sigmoid(y @ w2.T)                 # (B, C)
    return x * y[:, :, None, None]


if __name__ == "__main__":
    # channel must be >= reduction for PyTorch's channel // reduction to be > 0
    B, C, H, W = 2, 40, 16, 16
    reduction = 20
    hidden = C // reduction  # = 2

    key = jax.random.PRNGKey(0)
    kx, k1, k2 = jax.random.split(key, 3)
    x = jax.random.normal(kx, (B, C, H, W), dtype=jnp.float32)
    # Deterministic synthetic weights (both Linear layers have bias=False).
    w1 = jax.random.normal(k1, (hidden, C), dtype=jnp.float32) * 0.1  # fc1: C -> hidden
    w2 = jax.random.normal(k2, (C, hidden), dtype=jnp.float32) * 0.1  # fc2: hidden -> C

    out = se_layer(x, w1, w2)
    jax.block_until_ready(out)

    ref = _reference(x, w1, w2)
    assert out.shape == x.shape
    assert jnp.allclose(out, ref, atol=1e-5, rtol=1e-5), "mismatch vs reference"
    print("KERNEL_OK")
</pallas_src>

<mosaic_0001>
module attributes {stable_mosaic.version = 11 : i64} {
  func.func @_se_kernel(%arg0: i32, %arg1: memref<2x40x256xf32, #tpu.memory_space<vmem>>, %arg2: memref<2x40xf32, #tpu.memory_space<vmem>>, %arg3: memref<40x2xf32, #tpu.memory_space<vmem>>, %arg4: memref<2x40x256xf32, #tpu.memory_space<vmem>>) attributes {dimension_semantics = [#tpu.dimension_semantics<parallel>], iteration_bounds = array<i64: 1>, scalar_prefetch = 0 : i64, scratch_operands = 0 : i64, tpu.core_type = #tpu.core_type<tc>, window_params = [{transform_indices = @transform_0, window_bounds = array<i64: 2, 40, 256>}, {pipeline_mode = #tpu.pipeline_mode<synchronous>, transform_indices = @transform_1, window_bounds = array<i64: 2, 40>}, {pipeline_mode = #tpu.pipeline_mode<synchronous>, transform_indices = @transform_2, window_bounds = array<i64: 40, 2>}, {transform_indices = @transform_3, window_bounds = array<i64: 2, 40, 256>}]} {
    %c0 = arith.constant 0 : index
    %c0_0 = arith.constant 0 : index
    %c0_1 = arith.constant 0 : index
    %0 = vector.load %arg1[%c0, %c0_0, %c0_1] : memref<2x40x256xf32, #tpu.memory_space<vmem>>, vector<2x40x256xf32>
    %cst = arith.constant dense<0.000000e+00> : vector<2x40xf32>
    %1 = vector.multi_reduction <add>, %0, %cst [2] : vector<2x40x256xf32> to vector<2x40xf32>
    %cst_2 = arith.constant 3.906250e-03 : f32
    %2 = vector.broadcast %cst_2 : f32 to vector<2x40xf32>
    %3 = arith.mulf %1, %2 : vector<2x40xf32>
    %c0_3 = arith.constant 0 : index
    %c0_4 = arith.constant 0 : index
    %4 = vector.load %arg2[%c0_3, %c0_4] : memref<2x40xf32, #tpu.memory_space<vmem>>, vector<2x40xf32>
    %c0_5 = arith.constant 0 : index
    %c0_6 = arith.constant 0 : index
    %5 = vector.load %arg3[%c0_5, %c0_6] : memref<40x2xf32, #tpu.memory_space<vmem>>, vector<40x2xf32>
    %6 = vector.shape_cast %3 : vector<2x40xf32> to vector<2x1x40xf32>
    %7 = vector.shape_cast %4 : vector<2x40xf32> to vector<1x2x40xf32>
    %8 = vector.broadcast %6 : vector<2x1x40xf32> to vector<2x2x40xf32>
    %9 = vector.broadcast %7 : vector<1x2x40xf32> to vector<2x2x40xf32>
    %10 = arith.mulf %8, %9 : vector<2x2x40xf32>
    %cst_7 = arith.constant dense<0.000000e+00> : vector<2x2xf32>
    %11 = vector.multi_reduction <add>, %10, %cst_7 [2] : vector<2x2x40xf32> to vector<2x2xf32>
    %cst_8 = arith.constant 0.000000e+00 : f32
    %12 = vector.broadcast %cst_8 : f32 to vector<2x2xf32>
    %13 = arith.maximumf %11, %12 : vector<2x2xf32>
    %14 = vector.shape_cast %13 : vector<2x2xf32> to vector<2x1x2xf32>
    %15 = vector.shape_cast %5 : vector<40x2xf32> to vector<1x40x2xf32>
    %16 = vector.broadcast %14 : vector<2x1x2xf32> to vector<2x40x2xf32>
    %17 = vector.broadcast %15 : vector<1x40x2xf32> to vector<2x40x2xf32>
    %18 = arith.mulf %16, %17 : vector<2x40x2xf32>
    %cst_9 = arith.constant dense<0.000000e+00> : vector<2x40xf32>
    %19 = vector.multi_reduction <add>, %18, %cst_9 [2] : vector<2x40x2xf32> to vector<2x40xf32>
    %20 = arith.negf %19 : vector<2x40xf32>
    %21 = math.exp %20 : vector<2x40xf32>
    %cst_10 = arith.constant 1.000000e+00 : f32
    %22 = vector.broadcast %cst_10 : f32 to vector<2x40xf32>
    %23 = arith.addf %22, %21 : vector<2x40xf32>
    %24 = arith.divf %22, %23 : vector<2x40xf32>
    %25 = vector.shape_cast %24 : vector<2x40xf32> to vector<2x40x1xf32>
    %26 = vector.broadcast %25 : vector<2x40x1xf32> to vector<2x40x256xf32>
    %27 = arith.mulf %0, %26 : vector<2x40x256xf32>
    %c0_11 = arith.constant 0 : index
    %c0_12 = arith.constant 0 : index
    %c0_13 = arith.constant 0 : index
    %28 = vector.load %arg4[%c0_11, %c0_12, %c0_13] : memref<2x40x256xf32, #tpu.memory_space<vmem>>, vector<2x40x256xf32>
    tpu.vector_store %arg4[%c0_11, %c0_12, %c0_13], %27 {strides = array<i32>} : memref<2x40x256xf32, #tpu.memory_space<vmem>>, vector<2x40x256xf32>,
    return
  }
  func.func @transform_0(%arg0: i32) -> (i32, i32, i32) {
    %c0_i32 = arith.constant 0 : i32
    %c0_i32_0 = arith.constant 0 : i32
    %c0_i32_1 = arith.constant 0 : i32
    return %arg0, %c0_i32, %c0_i32_0 : i32, i32, i32
  }
  func.func @transform_1(%arg0: i32) -> (i32, i32) {
    %c0_i32 = arith.constant 0 : i32
    %c0_i32_0 = arith.constant 0 : i32
    %c0_i32_1 = arith.constant 0 : i32
    return %c0_i32, %c0_i32_0 : i32, i32
  }
  func.func @transform_2(%arg0: i32) -> (i32, i32) {
    %c0_i32 = arith.constant 0 : i32
    %c0_i32_0 = arith.constant 0 : i32
    %c0_i32_1 = arith.constant 0 : i32
    return %c0_i32, %c0_i32_0 : i32, i32
  }
  func.func @transform_3(%arg0: i32) -> (i32, i32, i32) {
    %c0_i32 = arith.constant 0 : i32
    %c0_i32_0 = arith.constant 0 : i32
    %c0_i32_1 = arith.constant 0 : i32
    return %arg0, %c0_i32, %c0_i32_0 : i32, i32, i32
  }
}

</mosaic_0001>

<llo_original>
// kernel: tpu_custom_call.1
$region0: #{tpu_custom_call.1}
  #allocation0 [shape = 'u32[]', space=smem, size = 0x4, offset = 0x4, fixed_abs, tag = 'smem constant byte address 0x4 - core index']
  #allocation1 [shape = 'u32[144,128]{1,0:T(1,128)}', space=vmem, size = 0x12000, scoped, tag = 'internal scratch']
  %s0 = inlined_call_operand.hbm [shape: f32[2,40,256], index: 0, kind: input, shape index: {}]
  %s1 = inlined_call_operand.vmem [shape: f32[2,40], index: 1, kind: input, shape index: {}]
  %s2 = inlined_call_operand.vmem [shape: f32[40,2], index: 2, kind: input, shape index: {}]
  %s3 = inlined_call_operand.hbm [shape: f32[2,40,256], index: 3, kind: output, shape index: {}]
  %s4 = sld [smem:[#allocation0]]
  $region26: #{tpu_custom_call.1} parent=0
    _
  %s6 = ssub.s32 1, %s4
  %s7 = scalar_select 0, %s6, %s4
  $region1: #{tpu_custom_call.1} parent=0
    #allocation2 [shape = 'u8[81920]{0}', space=vmem, size = 0x14000, scoped, tag = 'input window, operand 0, single buffered']
    #allocation3 [shape = 's32[1]{0}', space=sflag, size = 0x4, scoped, tag = 'scoped memory for tpu_custom_call.1']
    #allocation4 [shape = 's32[1]{0}', space=sflag, size = 0x4, scoped, tag = 'scoped memory for tpu_custom_call.1']
    #allocation5 [shape = 'u8[81920]{0}', space=vmem, size = 0x14000, scoped, tag = 'output window, operand 0, single buffered']
    %8 = vsyncpa [#allocation3], 0
    %9 = vsyncpa [#allocation4], 0
    // Predicated region
    $region2: #{tpu_custom_call.1} parent=1 // pred_check
      _
    $region3: #{tpu_custom_call.1} parent=1 // pred_check_branch
      %11 = sbr.rel (0) target = $region5
    $region4: #{tpu_custom_call.1} parent=1 // pred_region
      %s13 = ssub.s32 2560, 2560
      %14 = vsyncadd [#allocation3], %s13
      %s15 = sshll.u32 [#allocation2], 4
      %s16 = int_to_ptr.vmem [resolvable:$true] %s15
      %21 = dma.hbm_to_vmem [thread:$0]  %s0, 2560, %s16, [#allocation3], 256, 256, 16
    $region5: #{tpu_custom_call.1} parent=1 // pred_fallthru
      _
    // Predicated region
    $region6: #{tpu_custom_call.1} parent=1 // pred_check
      _
    $region7: #{tpu_custom_call.1} parent=1 // pred_check_branch
      %23 = sbr.rel (0) target = $region9
    $region8: #{tpu_custom_call.1} parent=1 // pred_region
      _
    $region9: #{tpu_custom_call.1} parent=1 // pred_fallthru
      _
    // Predicated region
    $region10: #{tpu_custom_call.1} parent=1 // pred_check
      _
    $region11: #{tpu_custom_call.1} parent=1 // pred_check_branch
      %25 = sbr.rel (0) target = $region13
    $region12: #{tpu_custom_call.1} parent=1 // pred_region
      _
    $region13: #{tpu_custom_call.1} parent=1 // pred_fallthru
      _
    // Predicated region
    $region14: #{tpu_custom_call.1} parent=1 // pred_check
      _
    $region15: #{tpu_custom_call.1} parent=1 // pred_check_branch
      %27 = sbr.rel (0) target = $region17
    $region16: #{tpu_custom_call.1} parent=1 // pred_region
      %28 = dma.done [#allocation3], 2560
    $region17: #{tpu_custom_call.1} parent=1 // pred_fallthru
      _
    %v29 = vld [vmem:[#allocation2] sm:$0xff]
    %v30 = vld [vmem:[#allocation2 + $0x8] sm:$0xff]
    %v31 = vld [vmem:[#allocation2 + $0x10] sm:$0xff]
    %v32 = vld [vmem:[#allocation2 + $0x18] sm:$0xff]
    %v33 = vld [vmem:[#allocation2 + $0x20] sm:$0xff]
    %v34 = vld [vmem:[#allocation2 + $0x28] sm:$0xff]
    %v35 = vld [vmem:[#allocation2 + $0x30] sm:$0xff]
    %v36 = vld [vmem:[#allocation2 + $0x38] sm:$0xff]
    %v37 = vld [vmem:[#allocation2 + $0x40] sm:$0xff]
    %v38 = vld [vmem:[#allocation2 + $0x48] sm:$0xff]
    %v39 = vld [vmem:[#allocation2 + $0x50] sm:$0xff]
    %v40 = vld [vmem:[#allocation2 + $0x58] sm:$0xff]
    %v41 = vld [vmem:[#allocation2 + $0x60] sm:$0xff]
    %v42 = vld [vmem:[#allocation2 + $0x68] sm:$0xff]
    %v43 = vld [vmem:[#allocation2 + $0x70] sm:$0xff]
    %v44 = vld [vmem:[#allocation2 + $0x78] sm:$0xff]
    %v45 = vld [vmem:[#allocation2 + $0x80] sm:$0xff]
    %v46 = vld [vmem:[#allocation2 + $0x88] sm:$0xff]
    %v47 = vld [vmem:[#allocation2 + $0x90] sm:$0xff]
    %v48 = vld [vmem:[#allocation2 + $0x98] sm:$0xff]
    %v49 = vadd.f32 %v29, %v30
    %50 = vadd.xlane.f32.xlu0 %v49
    %v51 = vpop.xlane.xlu0 %50
    %v52 = vadd.f32 %v31, %v32
    %53 = vadd.xlane.f32.xlu0 %v52
    %v54 = vpop.xlane.xlu0 %53
    %v55 = vadd.f32 %v33, %v34
    %56 = vadd.xlane.f32.xlu0 %v55
    %v57 = vpop.xlane.xlu0 %56
    %v58 = vadd.f32 %v35, %v36
    %59 = vadd.xlane.f32.xlu0 %v58
    %v60 = vpop.xlane.xlu0 %59
    %v61 = vadd.f32 %v37, %v38
    %62 = vadd.xlane.f32.xlu0 %v61
    %v63 = vpop.xlane.xlu0 %62
    %v64 = vadd.f32 %v39, %v40
    %65 = vadd.xlane.f32.xlu0 %v64
    %v66 = vpop.xlane.xlu0 %65
    %v67 = vadd.f32 %v41, %v42
    %68 = vadd.xlane.f32.xlu0 %v67
    %v69 = vpop.xlane.xlu0 %68
    %v70 = vadd.f32 %v43, %v44
    %71 = vadd.xlane.f32.xlu0 %v70
    %v72 = vpop.xlane.xlu0 %71
    %v73 = vadd.f32 %v45, %v46
    %74 = vadd.xlane.f32.xlu0 %v73
    %v75 = vpop.xlane.xlu0 %74
    %v76 = vadd.f32 %v47, %v48
    %77 = vadd.xlane.f32.xlu0 %v76
    %v78 = vpop.xlane.xlu0 %77
    %v79 = vmul.f32 %v51, 0.00390625
    %v80 = vmul.f32 %v54, 0.00390625
    %v81 = vmul.f32 %v57, 0.00390625
    %v82 = vmul.f32 %v60, 0.00390625
    %v83 = vmul.f32 %v63, 0.00390625
    %v84 = vmul.f32 %v66, 0.00390625
    %v85 = vmul.f32 %v69, 0.00390625
    %v86 = vmul.f32 %v72, 0.00390625
    %v87 = vmul.f32 %v75, 0.00390625
    %v88 = vmul.f32 %v78, 0.00390625
    %v89 = vld [vmem:[%s1] sm:$0x3]
    %v90 = vld [vmem:[%s2] sm:$0xff]
    %v91 = vld [vmem:[%s2 + $0x8] sm:$0xff]
    %v92 = vld [vmem:[%s2 + $0x10] sm:$0xff]
    %v93 = vld [vmem:[%s2 + $0x18] sm:$0xff]
    %v94 = vld [vmem:[%s2 + $0x20] sm:$0xff]
    %v96 = vlaneseq
    %v97 = vshrl.u32 %v96, 7
    %v98 = vsub.s32 0, %v97
    %v99 = vrot.slane %v89, %v98
    %101 = vbcast.lane.b32.xlu0 %v99, 256
    %v102 = vpop.permute.xlu0 %101
    %s104 = sor.u32 256, 8
    %105 = vbcast.lane.b32.xlu0 %v99, %s104
    %v106 = vpop.permute.xlu0 %105
    %s108 = sor.u32 256, 16
    %109 = vbcast.lane.b32.xlu0 %v99, %s108
    %v110 = vpop.permute.xlu0 %109
    %s112 = sor.u32 256, 24
    %113 = vbcast.lane.b32.xlu0 %v99, %s112
    %v114 = vpop.permute.xlu0 %113
    %s116 = sor.u32 256, 32
    %117 = vbcast.lane.b32.xlu0 %v99, %s116
    %v118 = vpop.permute.xlu0 %117
    %v119 = vlaneseq
    %v120 = vshrl.u32 %v119, 7
    %v121 = vsub.s32 1, %v120
    %v122 = vrot.slane %v89, %v121
    %124 = vbcast.lane.b32.xlu0 %v122, 256
    %v125 = vpop.permute.xlu0 %124
    %s127 = sor.u32 256, 8
    %128 = vbcast.lane.b32.xlu0 %v122, %s127
    %v129 = vpop.permute.xlu0 %128
    %s131 = sor.u32 256, 16
    %132 = vbcast.lane.b32.xlu0 %v122, %s131
    %v133 = vpop.permute.xlu0 %132
    %s135 = sor.u32 256, 24
    %136 = vbcast.lane.b32.xlu0 %v122, %s135
    %v137 = vpop.permute.xlu0 %136
    %s139 = sor.u32 256, 32
    %140 = vbcast.lane.b32.xlu0 %v122, %s139
    %v141 = vpop.permute.xlu0 %140
    %v152 = vmul.f32 %v79, %v102
    %v153 = vmul.f32 %v80, %v106
    %v154 = vmul.f32 %v81, %v110
    %v155 = vmul.f32 %v82, %v114
    %v156 = vmul.f32 %v83, %v118
    %v157 = vmul.f32 %v79, %v125
    %v158 = vmul.f32 %v80, %v129
    %v159 = vmul.f32 %v81, %v133
    %v160 = vmul.f32 %v82, %v137
    %v161 = vmul.f32 %v83, %v141
    %v162 = vmul.f32 %v84, %v102
    %v163 = vmul.f32 %v85, %v106
    %v164 = vmul.f32 %v86, %v110
    %v165 = vmul.f32 %v87, %v114
    %v166 = vmul.f32 %v88, %v118
    %v167 = vmul.f32 %v84, %v125
    %v168 = vmul.f32 %v85, %v129
    %v169 = vmul.f32 %v86, %v133
    %v170 = vmul.f32 %v87, %v137
    %v171 = vmul.f32 %v88, %v141
    %192 = vset.pattern.permute.xlu0 0
    %193 = vperm.xlu0 %192, %v152
    %v194 = vpop.permute.xlu0 %193
    %195 = vset.pattern.permute.xlu0 0
    %196 = vperm.xlu0 %195, %v153
    %v197 = vpop.permute.xlu0 %196
    %198 = vset.pattern.permute.xlu0 0
    %199 = vperm.xlu0 %198, %v154
    %v200 = vpop.permute.xlu0 %199
    %201 = vset.pattern.permute.xlu0 0
    %202 = vperm.xlu0 %201, %v155
    %v203 = vpop.permute.xlu0 %202
    %204 = vset.pattern.permute.xlu0 0
    %205 = vperm.xlu0 %204, %v156
    %v206 = vpop.permute.xlu0 %205
    %207 = vset.pattern.permute.xlu0 0
    %208 = vperm.xlu0 %207, %v157
    %v209 = vpop.permute.xlu0 %208
    %210 = vset.pattern.permute.xlu0 0
    %211 = vperm.xlu0 %210, %v158
    %v212 = vpop.permute.xlu0 %211
    %213 = vset.pattern.permute.xlu0 0
    %214 = vperm.xlu0 %213, %v159
    %v215 = vpop.permute.xlu0 %214
    %216 = vset.pattern.permute.xlu0 0
    %217 = vperm.xlu0 %216, %v160
    %v218 = vpop.permute.xlu0 %217
    %219 = vset.pattern.permute.xlu0 0
    %220 = vperm.xlu0 %219, %v161
    %v221 = vpop.permute.xlu0 %220
    %222 = vset.pattern.permute.xlu0 0
    %223 = vperm.xlu0 %222, %v162
    %v224 = vpop.permute.xlu0 %223
    %225 = vset.pattern.permute.xlu0 0
    %226 = vperm.xlu0 %225, %v163
    %v227 = vpop.permute.xlu0 %226
    %228 = vset.pattern.permute.xlu0 0
    %229 = vperm.xlu0 %228, %v164
    %v230 = vpop.permute.xlu0 %229
    %231 = vset.pattern.permute.xlu0 0
    %232 = vperm.xlu0 %231, %v165
    %v233 = vpop.permute.xlu0 %232
    %234 = vset.pattern.permute.xlu0 0
    %235 = vperm.xlu0 %234, %v166
    %v236 = vpop.permute.xlu0 %235
    %237 = vset.pattern.permute.xlu0 0
    %238 = vperm.xlu0 %237, %v167
    %v239 = vpop.permute.xlu0 %238
    %240 = vset.pattern.permute.xlu0 0
    %241 = vperm.xlu0 %240, %v168
    %v242 = vpop.permute.xlu0 %241
    %243 = vset.pattern.permute.xlu0 0
    %244 = vperm.xlu0 %243, %v169
    %v245 = vpop.permute.xlu0 %244
    %246 = vset.pattern.permute.xlu0 0
    %247 = vperm.xlu0 %246, %v170
    %v248 = vpop.permute.xlu0 %247
    %249 = vset.pattern.permute.xlu0 0
    %250 = vperm.xlu0 %249, %v171
    %v251 = vpop.permute.xlu0 %250
    %v252 = vlaneseq
    %v253 = vand.u32 %v252, 127
    %v254 = vlaneseq
    %v255 = vshrl.u32 %v254, 7
    %v256 = vsub.s32 %v253, %v255
    %v257 = vrot.slane %v194, %v256
    %v258 = vadd.s32 %v253, 4294967288
    %v259 = vlaneseq
    %v260 = vshrl.u32 %v259, 7
    %v261 = vsub.s32 %v258, %v260
    %v262 = vrot.slane %v197, %v261
    %vm263 = vcmask 130112
    %v264 = vsel %vm263, %v262, %v257
    %v265 = vadd.s32 %v253, 4294967280
    %v266 = vlaneseq
    %v267 = vshrl.u32 %v266, 7
    %v268 = vsub.s32 %v265, %v267
    %v269 = vrot.slane %v200, %v268
    %vm270 = vcmask 195712
    %v271 = vsel %vm270, %v269, %v264
    %v272 = vadd.s32 %v253, 4294967272
    %v273 = vlaneseq
    %v274 = vshrl.u32 %v273, 7
    %v275 = vsub.s32 %v272, %v274
    %v276 = vrot.slane %v203, %v275
    %vm277 = vcmask 261312
    %v278 = vsel %vm277, %v276, %v271
    %v279 = vadd.s32 %v253, 4294967264
    %v280 = vlaneseq
    %v281 = vshrl.u32 %v280, 7
    %v282 = vsub.s32 %v279, %v281
    %v283 = vrot.slane %v206, %v282
    %vm284 = vcmask 326912
    %v285 = vsel %vm284, %v283, %v278
    %v286 = vlaneseq
    %v287 = vshrl.u32 %v286, 7
    %v288 = vsub.s32 %v253, %v287
    %v289 = vrot.slane %v209, %v288
    %v290 = vlaneseq
    %v291 = vshrl.u32 %v290, 7
    %v292 = vsub.s32 %v258, %v291
    %v293 = vrot.slane %v212, %v292
    %v294 = vsel %vm263, %v293, %v289
    %v295 = vlaneseq
    %v296 = vshrl.u32 %v295, 7
    %v297 = vsub.s32 %v265, %v296
    %v298 = vrot.slane %v215, %v297
    %v299 = vsel %vm270, %v298, %v294
    %v300 = vlaneseq
    %v301 = vshrl.u32 %v300, 7
    %v302 = vsub.s32 %v272, %v301
    %v303 = vrot.slane %v218, %v302
    %v304 = vsel %vm277, %v303, %v299
    %v305 = vlaneseq
    %v306 = vshrl.u32 %v305, 7
    %v307 = vsub.s32 %v279, %v306
    %v308 = vrot.slane %v221, %v307
    %v309 = vsel %vm284, %v308, %v304
    %v310 = vlaneseq
    %v311 = vshrl.u32 %v310, 7
    %v312 = vsub.s32 %v253, %v311
    %v313 = vrot.slane %v224, %v312
    %v314 = vlaneseq
    %v315 = vshrl.u32 %v314, 7
    %v316 = vsub.s32 %v258, %v315
    %v317 = vrot.slane %v227, %v316
    %v318 = vsel %vm263, %v317, %v313
    %v319 = vlaneseq
    %v320 = vshrl.u32 %v319, 7
    %v321 = vsub.s32 %v265, %v320
    %v322 = vrot.slane %v230, %v321
    %v323 = vsel %vm270, %v322, %v318
    %v324 = vlaneseq
    %v325 = vshrl.u32 %v324, 7
    %v326 = vsub.s32 %v272, %v325
    %v327 = vrot.slane %v233, %v326
    %v328 = vsel %vm277, %v327, %v323
    %v329 = vlaneseq
    %v330 = vshrl.u32 %v329, 7
    %v331 = vsub.s32 %v279, %v330
    %v332 = vrot.slane %v236, %v331
    %v333 = vsel %vm284, %v332, %v328
    %v334 = vlaneseq
    %v335 = vshrl.u32 %v334, 7
    %v336 = vsub.s32 %v253, %v335
    %v337 = vrot.slane %v239, %v336
    %v338 = vlaneseq
    %v339 = vshrl.u32 %v338, 7
    %v340 = vsub.s32 %v258, %v339
    %v341 = vrot.slane %v242, %v340
    %v342 = vsel %vm263, %v341, %v337
    %v343 = vlaneseq
    %v344 = vshrl.u32 %v343, 7
    %v345 = vsub.s32 %v265, %v344
    %v346 = vrot.slane %v245, %v345
    %v347 = vsel %vm270, %v346, %v342
    %v348 = vlaneseq
    %v349 = vshrl.u32 %v348, 7
    %v350 = vsub.s32 %v272, %v349
    %v351 = vrot.slane %v248, %v350
    %v352 = vsel %vm277, %v351, %v347
    %v353 = vlaneseq
    %v354 = vshrl.u32 %v353, 7
    %v355 = vsub.s32 %v279, %v354
    %v356 = vrot.slane %v251, %v355
    %v357 = vsel %vm284, %v356, %v352
    %vm358 = vcmask 1041409
    %v359 = vsel %vm358, %v309, %v285
    %v360 = vsel %vm358, %v357, %v333
    %vm363 = vcmask 320512
    %v364 = vsel %vm363, %v359, 0.0
    %365 = vadd.xlane.f32.xlu0 %v364
    %v366 = vpop.xlane.xlu0 %365
    %v367 = vsel %vm363, %v360, 0.0
    %368 = vadd.xlane.f32.xlu0 %v367
    %v369 = vpop.xlane.xlu0 %368
    %v370 = vmax.f32 %v366, 0.0
    %v371 = vmax.f32 %v369, 0.0
    %v377 = vlaneseq
    %v378 = vshrl.u32 %v377, 7
    %v379 = vsub.s32 0, %v378
    %v380 = vrot.slane %v90, %v379
    %382 = vbcast.lane.b32.xlu0 %v380, 256
    %v383 = vpop.permute.xlu0 %382
    %v384 = vlaneseq
    %v385 = vshrl.u32 %v384, 7
    %v386 = vsub.s32 1, %v385
    %v387 = vrot.slane %v90, %v386
    %389 = vbcast.lane.b32.xlu0 %v387, 256
    %v390 = vpop.permute.xlu0 %389
    %v391 = vlaneseq
    %v392 = vshrl.u32 %v391, 7
    %v393 = vsub.s32 2, %v392
    %v394 = vrot.slane %v90, %v393
    %396 = vbcast.lane.b32.xlu0 %v394, 256
    %v397 = vpop.permute.xlu0 %396
    %v398 = vlaneseq
    %v399 = vshrl.u32 %v398, 7
    %v400 = vsub.s32 3, %v399
    %v401 = vrot.slane %v90, %v400
    %403 = vbcast.lane.b32.xlu0 %v401, 256
    %v404 = vpop.permute.xlu0 %403
    %v405 = vlaneseq
    %v406 = vshrl.u32 %v405, 7
    %v407 = vsub.s32 4, %v406
    %v408 = vrot.slane %v90, %v407
    %410 = vbcast.lane.b32.xlu0 %v408, 256
    %v411 = vpop.permute.xlu0 %410
    %v412 = vlaneseq
    %v413 = vshrl.u32 %v412, 7
    %v414 = vsub.s32 5, %v413
    %v415 = vrot.slane %v90, %v414
    %417 = vbcast.lane.b32.xlu0 %v415, 256
    %v418 = vpop.permute.xlu0 %417
    %v419 = vlaneseq
    %v420 = vshrl.u32 %v419, 7
    %v421 = vsub.s32 6, %v420
    %v422 = vrot.slane %v90, %v421
    %424 = vbcast.lane.b32.xlu0 %v422, 256
    %v425 = vpop.permute.xlu0 %424
    %v426 = vlaneseq
    %v427 = vshrl.u32 %v426, 7
    %v428 = vsub.s32 7, %v427
    %v429 = vrot.slane %v90, %v428
    %431 = vbcast.lane.b32.xlu0 %v429, 256
    %v432 = vpop.permute.xlu0 %431
    %v433 = vlaneseq
    %v434 = vshrl.u32 %v433, 7
    %v435 = vsub.s32 0, %v434
    %v436 = vrot.slane %v91, %v435
    %438 = vbcast.lane.b32.xlu0 %v436, 256
    %v439 = vpop.permute.xlu0 %438
    %v440 = vlaneseq
    %v441 = vshrl.u32 %v440, 7
    %v442 = vsub.s32 1, %v441
    %v443 = vrot.slane %v91, %v442
    %445 = vbcast.lane.b32.xlu0 %v443, 256
    %v446 = vpop.permute.xlu0 %445
    %v447 = vlaneseq
    %v448 = vshrl.u32 %v447, 7
    %v449 = vsub.s32 2, %v448
    %v450 = vrot.slane %v91, %v449
    %452 = vbcast.lane.b32.xlu0 %v450, 256
    %v453 = vpop.permute.xlu0 %452
    %v454 = vlaneseq
    %v455 = vshrl.u32 %v454, 7
    %v456 = vsub.s32 3, %v455
    %v457 = vrot.slane %v91, %v456
    %459 = vbcast.lane.b32.xlu0 %v457, 256
    %v460 = vpop.permute.xlu0 %459
    %v461 = vlaneseq
    %v462 = vshrl.u32 %v461, 7
    %v463 = vsub.s32 4, %v462
    %v464 = vrot.slane %v91, %v463
    %466 = vbcast.lane.b32.xlu0 %v464, 256
    %v467 = vpop.permute.xlu0 %466
    %v468 = vlaneseq
    %v469 = vshrl.u32 %v468, 7
    %v470 = vsub.s32 5, %v469
    %v471 = vrot.slane %v91, %v470
    %473 = vbcast.lane.b32.xlu0 %v471, 256
    %v474 = vpop.permute.xlu0 %473
    %v475 = vlaneseq
    %v476 = vshrl.u32 %v475, 7
    %v477 = vsub.s32 6, %v476
    %v478 = vrot.slane %v91, %v477
    %480 = vbcast.lane.b32.xlu0 %v478, 256
    %v481 = vpop.permute.xlu0 %480
    %v482 = vlaneseq
    %v483 = vshrl.u32 %v482, 7
    %v484 = vsub.s32 7, %v483
    %v485 = vrot.slane %v91, %v484
    %487 = vbcast.lane.b32.xlu0 %v485, 256
    %v488 = vpop.permute.xlu0 %487
    %v489 = vlaneseq
    %v490 = vshrl.u32 %v489, 7
    %v491 = vsub.s32 0, %v490
    %v492 = vrot.slane %v92, %v491
    %494 = vbcast.lane.b32.xlu0 %v492, 256
    %v495 = vpop.permute.xlu0 %494
    %v496 = vlaneseq
    %v497 = vshrl.u32 %v496, 7
    %v498 = vsub.s32 1, %v497
    %v499 = vrot.slane %v92, %v498
    %501 = vbcast.lane.b32.xlu0 %v499, 256
    %v502 = vpop.permute.xlu0 %501
    %v503 = vlaneseq
    %v504 = vshrl.u32 %v503, 7
    %v505 = vsub.s32 2, %v504
    %v506 = vrot.slane %v92, %v505
    %508 = vbcast.lane.b32.xlu0 %v506, 256
    %v509 = vpop.permute.xlu0 %508
    %v510 = vlaneseq
    %v511 = vshrl.u32 %v510, 7
    %v512 = vsub.s32 3, %v511
    %v513 = vrot.slane %v92, %v512
    %515 = vbcast.lane.b32.xlu0 %v513, 256
    %v516 = vpop.permute.xlu0 %515
    %v517 = vlaneseq
    %v518 = vshrl.u32 %v517, 7
    %v519 = vsub.s32 4, %v518
    %v520 = vrot.slane %v92, %v519
    %522 = vbcast.lane.b32.xlu0 %v520, 256
    %v523 = vpop.permute.xlu0 %522
    %v524 = vlaneseq
    %v525 = vshrl.u32 %v524, 7
    %v526 = vsub.s32 5, %v525
    %v527 = vrot.slane %v92, %v526
    %529 = vbcast.lane.b32.xlu0 %v527, 256
    %v530 = vpop.permute.xlu0 %529
    %v531 = vlaneseq
    %v532 = vshrl.u32 %v531, 7
    %v533 = vsub.s32 6, %v532
    %v534 = vrot.slane %v92, %v533
    %536 = vbcast.lane.b32.xlu0 %v534, 256
    %v537 = vpop.permute.xlu0 %536
    %v538 = vlaneseq
    %v539 = vshrl.u32 %v538, 7
    %v540 = vsub.s32 7, %v539
    %v541 = vrot.slane %v92, %v540
    %543 = vbcast.lane.b32.xlu0 %v541, 256
    %v544 = vpop.permute.xlu0 %543
    %v545 = vlaneseq
    %v546 = vshrl.u32 %v545, 7
    %v547 = vsub.s32 0, %v546
    %v548 = vrot.slane %v93, %v547
    %550 = vbcast.lane.b32.xlu0 %v548, 256
    %v551 = vpop.permute.xlu0 %550
    %v552 = vlaneseq
    %v553 = vshrl.u32 %v552, 7
    %v554 = vsub.s32 1, %v553
    %v555 = vrot.slane %v93, %v554
    %557 = vbcast.lane.b32.xlu0 %v555, 256
    %v558 = vpop.permute.xlu0 %557
    %v559 = vlaneseq
    %v560 = vshrl.u32 %v559, 7
    %v561 = vsub.s32 2, %v560
    %v562 = vrot.slane %v93, %v561
    %564 = vbcast.lane.b32.xlu0 %v562, 256
    %v565 = vpop.permute.xlu0 %564
    %v566 = vlaneseq
    %v567 = vshrl.u32 %v566, 7
    %v568 = vsub.s32 3, %v567
    %v569 = vrot.slane %v93, %v568
    %571 = vbcast.lane.b32.xlu0 %v569, 256
    %v572 = vpop.permute.xlu0 %571
    %v573 = vlaneseq
    %v574 = vshrl.u32 %v573, 7
    %v575 = vsub.s32 4, %v574
    %v576 = vrot.slane %v93, %v575
    %578 = vbcast.lane.b32.xlu0 %v576, 256
    %v579 = vpop.permute.xlu0 %578
    %v580 = vlaneseq
    %v581 = vshrl.u32 %v580, 7
    %v582 = vsub.s32 5, %v581
    %v583 = vrot.slane %v93, %v582
    %585 = vbcast.lane.b32.xlu0 %v583, 256
    %v586 = vpop.permute.xlu0 %585
    %v587 = vlaneseq
    %v588 = vshrl.u32 %v587, 7
    %v589 = vsub.s32 6, %v588
    %v590 = vrot.slane %v93, %v589
    %592 = vbcast.lane.b32.xlu0 %v590, 256
    %v593 = vpop.permute.xlu0 %592
    %v594 = vlaneseq
    %v595 = vshrl.u32 %v594, 7
    %v596 = vsub.s32 7, %v595
    %v597 = vrot.slane %v93, %v596
    %599 = vbcast.lane.b32.xlu0 %v597, 256
    %v600 = vpop.permute.xlu0 %599
    %v601 = vlaneseq
    %v602 = vshrl.u32 %v601, 7
    %v603 = vsub.s32 0, %v602
    %v604 = vrot.slane %v94, %v603
    %606 = vbcast.lane.b32.xlu0 %v604, 256
    %v607 = vpop.permute.xlu0 %606
    %v608 = vlaneseq
    %v609 = vshrl.u32 %v608, 7
    %v610 = vsub.s32 1, %v609
    %v611 = vrot.slane %v94, %v610
    %613 = vbcast.lane.b32.xlu0 %v611, 256
    %v614 = vpop.permute.xlu0 %613
    %v615 = vlaneseq
    %v616 = vshrl.u32 %v615, 7
    %v617 = vsub.s32 2, %v616
    %v618 = vrot.slane %v94, %v617
    %620 = vbcast.lane.b32.xlu0 %v618, 256
    %v621 = vpop.permute.xlu0 %620
    %v622 = vlaneseq
    %v623 = vshrl.u32 %v622, 7
    %v624 = vsub.s32 3, %v623
    %v625 = vrot.slane %v94, %v624
    %627 = vbcast.lane.b32.xlu0 %v625, 256
    %v628 = vpop.permute.xlu0 %627
    %v629 = vlaneseq
    %v630 = vshrl.u32 %v629, 7
    %v631 = vsub.s32 4, %v630
    %v632 = vrot.slane %v94, %v631
    %634 = vbcast.lane.b32.xlu0 %v632, 256
    %v635 = vpop.permute.xlu0 %634
    %v636 = vlaneseq
    %v637 = vshrl.u32 %v636, 7
    %v638 = vsub.s32 5, %v637
    %v639 = vrot.slane %v94, %v638
    %641 = vbcast.lane.b32.xlu0 %v639, 256
    %v642 = vpop.permute.xlu0 %641
    %v643 = vlaneseq
    %v644 = vshrl.u32 %v643, 7
    %v645 = vsub.s32 6, %v644
    %v646 = vrot.slane %v94, %v645
    %648 = vbcast.lane.b32.xlu0 %v646, 256
    %v649 = vpop.permute.xlu0 %648
    %v650 = vlaneseq
    %v651 = vshrl.u32 %v650, 7
    %v652 = vsub.s32 7, %v651
    %v653 = vrot.slane %v94, %v652
    %655 = vbcast.lane.b32.xlu0 %v653, 256
    %v656 = vpop.permute.xlu0 %655
    %v697 = vmul.f32 %v370, %v383
    %v698 = vmul.f32 %v370, %v390
    %v699 = vmul.f32 %v370, %v397
    %v700 = vmul.f32 %v370, %v404
    %v701 = vmul.f32 %v370, %v411
    %v702 = vmul.f32 %v370, %v418
    %v703 = vmul.f32 %v370, %v425
    %v704 = vmul.f32 %v370, %v432
    %v705 = vmul.f32 %v370, %v439
    %v706 = vmul.f32 %v370, %v446
    %v707 = vmul.f32 %v370, %v453
    %v708 = vmul.f32 %v370, %v460
    %v709 = vmul.f32 %v370, %v467
    %v710 = vmul.f32 %v370, %v474
    %v711 = vmul.f32 %v370, %v481
    %v712 = vmul.f32 %v370, %v488
    %v713 = vmul.f32 %v370, %v495
    %v714 = vmul.f32 %v370, %v502
    %v715 = vmul.f32 %v370, %v509
    %v716 = vmul.f32 %v370, %v516
    %v717 = vmul.f32 %v370, %v523
    %v718 = vmul.f32 %v370, %v530
    %v719 = vmul.f32 %v370, %v537
    %v720 = vmul.f32 %v370, %v544
    %v721 = vmul.f32 %v370, %v551
    %v722 = vmul.f32 %v370, %v558
    %v723 = vmul.f32 %v370, %v565
    %v724 = vmul.f32 %v370, %v572
    %v725 = vmul.f32 %v370, %v579
    %v726 = vmul.f32 %v370, %v586
    %v727 = vmul.f32 %v370, %v593
    %v728 = vmul.f32 %v370, %v600
    %v729 = vmul.f32 %v370, %v607
    %v730 = vmul.f32 %v370, %v614
    %v731 = vmul.f32 %v370, %v621
    %v732 = vmul.f32 %v370, %v628
    %v733 = vmul.f32 %v370, %v635
    %v734 = vmul.f32 %v370, %v642
    %v735 = vmul.f32 %v370, %v649
    %v736 = vmul.f32 %v370, %v656
    %v737 = vmul.f32 %v371, %v383
    %v738 = vmul.f32 %v371, %v390
    %v739 = vmul.f32 %v371, %v397
    %v740 = vmul.f32 %v371, %v404
    %v741 = vmul.f32 %v371, %v411
    %v742 = vmul.f32 %v371, %v418
    %v743 = vmul.f32 %v371, %v425
    %v744 = vmul.f32 %v371, %v432
    %v745 = vmul.f32 %v371, %v439
    %v746 = vmul.f32 %v371, %v446
    %v747 = vmul.f32 %v371, %v453
    %v748 = vmul.f32 %v371, %v460
    %v749 = vmul.f32 %v371, %v467
    %v750 = vmul.f32 %v371, %v474
    %v751 = vmul.f32 %v371, %v481
    %v752 = vmul.f32 %v371, %v488
    %v753 = vmul.f32 %v371, %v495
    %v754 = vmul.f32 %v371, %v502
    %v755 = vmul.f32 %v371, %v509
    %v756 = vmul.f32 %v371, %v516
    %v757 = vmul.f32 %v371, %v523
    %v758 = vmul.f32 %v371, %v530
    %v759 = vmul.f32 %v371, %v537
    %v760 = vmul.f32 %v371, %v544
    %v761 = vmul.f32 %v371, %v551
    %v762 = vmul.f32 %v371, %v558
    %v763 = vmul.f32 %v371, %v565
    %v764 = vmul.f32 %v371, %v572
    %v765 = vmul.f32 %v371, %v579
    %v766 = vmul.f32 %v371, %v586
    %v767 = vmul.f32 %v371, %v593
    %v768 = vmul.f32 %v371, %v600
    %v769 = vmul.f32 %v371, %v607
    %v770 = vmul.f32 %v371, %v614
    %v771 = vmul.f32 %v371, %v621
    %v772 = vmul.f32 %v371, %v628
    %v773 = vmul.f32 %v371, %v635
    %v774 = vmul.f32 %v371, %v642
    %v775 = vmul.f32 %v371, %v649
    %v776 = vmul.f32 %v371, %v656
    %857 = vset.pattern.permute.xlu0 0
    %858 = vperm.xlu0 %857, %v697
    %v859 = vpop.permute.xlu0 %858
    %860 = vset.pattern.permute.xlu0 0
    %861 = vperm.xlu0 %860, %v698
    %v862 = vpop.permute.xlu0 %861
    %863 = vset.pattern.permute.xlu0 0
    %864 = vperm.xlu0 %863, %v699
    %v865 = vpop.permute.xlu0 %864
    %866 = vset.pattern.permute.xlu0 0
    %867 = vperm.xlu0 %866, %v700
    %v868 = vpop.permute.xlu0 %867
    %869 = vset.pattern.permute.xlu0 0
    %870 = vperm.xlu0 %869, %v701
    %v871 = vpop.permute.xlu0 %870
    %872 = vset.pattern.permute.xlu0 0
    %873 = vperm.xlu0 %872, %v702
    %v874 = vpop.permute.xlu0 %873
    %875 = vset.pattern.permute.xlu0 0
    %876 = vperm.xlu0 %875, %v703
    %v877 = vpop.permute.xlu0 %876
    %878 = vset.pattern.permute.xlu0 0
    %879 = vperm.xlu0 %878, %v704
    %v880 = vpop.permute.xlu0 %879
    %881 = vset.pattern.permute.xlu0 0
    %882 = vperm.xlu0 %881, %v705
    %v883 = vpop.permute.xlu0 %882
    %884 = vset.pattern.permute.xlu0 0
    %885 = vperm.xlu0 %884, %v706
    %v886 = vpop.permute.xlu0 %885
    %887 = vset.pattern.permute.xlu0 0
    %888 = vperm.xlu0 %887, %v707
    %v889 = vpop.permute.xlu0 %888
    %890 = vset.pattern.permute.xlu0 0
    %891 = vperm.xlu0 %890, %v708
    %v892 = vpop.permute.xlu0 %891
    %893 = vset.pattern.permute.xlu0 0
    %894 = vperm.xlu0 %893, %v709
    %v895 = vpop.permute.xlu0 %894
    %896 = vset.pattern.permute.xlu0 0
    %897 = vperm.xlu0 %896, %v710
    %v898 = vpop.permute.xlu0 %897
    %899 = vset.pattern.permute.xlu0 0
    %900 = vperm.xlu0 %899, %v711
    %v901 = vpop.permute.xlu0 %900
    %902 = vset.pattern.permute.xlu0 0
    %903 = vperm.xlu0 %902, %v712
    %v904 = vpop.permute.xlu0 %903
    %905 = vset.pattern.permute.xlu0 0
    %906 = vperm.xlu0 %905, %v713
    %v907 = vpop.permute.xlu0 %906
    %908 = vset.pattern.permute.xlu0 0
    %909 = vperm.xlu0 %908, %v714
    %v910 = vpop.permute.xlu0 %909
    %911 = vset.pattern.permute.xlu0 0
    %912 = vperm.xlu0 %911, %v715
    %v913 = vpop.permute.xlu0 %912
    %914 = vset.pattern.permute.xlu0 0
    %915 = vperm.xlu0 %914, %v716
    %v916 = vpop.permute.xlu0 %915
    %917 = vset.pattern.permute.xlu0 0
    %918 = vperm.xlu0 %917, %v717
    %v919 = vpop.permute.xlu0 %918
    %920 = vset.pattern.permute.xlu0 0
    %921 = vperm.xlu0 %920, %v718
    %v922 = vpop.permute.xlu0 %921
    %923 = vset.pattern.permute.xlu0 0
    %924 = vperm.xlu0 %923, %v719
    %v925 = vpop.permute.xlu0 %924
    %926 = vset.pattern.permute.xlu0 0
    %927 = vperm.xlu0 %926, %v720
    %v928 = vpop.permute.xlu0 %927
    %929 = vset.pattern.permute.xlu0 0
    %930 = vperm.xlu0 %929, %v721
    %v931 = vpop.permute.xlu0 %930
    %932 = vset.pattern.permute.xlu0 0
    %933 = vperm.xlu0 %932, %v722
    %v934 = vpop.permute.xlu0 %933
    %935 = vset.pattern.permute.xlu0 0
    %936 = vperm.xlu0 %935, %v723
    %v937 = vpop.permute.xlu0 %936
    %938 = vset.pattern.permute.xlu0 0
    %939 = vperm.xlu0 %938, %v724
    %v940 = vpop.permute.xlu0 %939
    %941 = vset.pattern.permute.xlu0 0
    %942 = vperm.xlu0 %941, %v725
    %v943 = vpop.permute.xlu0 %942
    %944 = vset.pattern.permute.xlu0 0
    %945 = vperm.xlu0 %944, %v726
    %v946 = vpop.permute.xlu0 %945
    %947 = vset.pattern.permute.xlu0 0
    %948 = vperm.xlu0 %947, %v727
    %v949 = vpop.permute.xlu0 %948
    %950 = vset.pattern.permute.xlu0 0
    %951 = vperm.xlu0 %950, %v728
    %v952 = vpop.permute.xlu0 %951
    %953 = vset.pattern.permute.xlu0 0
    %954 = vperm.xlu0 %953, %v729
    %v955 = vpop.permute.xlu0 %954
    %956 = vset.pattern.permute.xlu0 0
    %957 = vperm.xlu0 %956, %v730
    %v958 = vpop.permute.xlu0 %957
    %959 = vset.pattern.permute.xlu0 0
    %960 = vperm.xlu0 %959, %v731
    %v961 = vpop.permute.xlu0 %960
    %962 = vset.pattern.permute.xlu0 0
    %963 = vperm.xlu0 %962, %v732
    %v964 = vpop.permute.xlu0 %963
    %965 = vset.pattern.permute.xlu0 0
    %966 = vperm.xlu0 %965, %v733
    %v967 = vpop.permute.xlu0 %966
    %968 = vset.pattern.permute.xlu0 0
    %969 = vperm.xlu0 %968, %v734
    %v970 = vpop.permute.xlu0 %969
    %971 = vset.pattern.permute.xlu0 0
    %972 = vperm.xlu0 %971, %v735
    %v973 = vpop.permute.xlu0 %972
    %974 = vset.pattern.permute.xlu0 0
    %975 = vperm.xlu0 %974, %v736
    %v976 = vpop.permute.xlu0 %975
    %977 = vset.pattern.permute.xlu0 0
    %978 = vperm.xlu0 %977, %v737
    %v979 = vpop.permute.xlu0 %978
    %980 = vset.pattern.permute.xlu0 0
    %981 = vperm.xlu0 %980, %v738
    %v982 = vpop.permute.xlu0 %981
    %983 = vset.pattern.permute.xlu0 0
    %984 = vperm.xlu0 %983, %v739
    %v985 = vpop.permute.xlu0 %984
    %986 = vset.pattern.permute.xlu0 0
    %987 = vperm.xlu0 %986, %v740
    %v988 = vpop.permute.xlu0 %987
    %989 = vset.pattern.permute.xlu0 0
    %990 = vperm.xlu0 %989, %v741
    %v991 = vpop.permute.xlu0 %990
    %992 = vset.pattern.permute.xlu0 0
    %993 = vperm.xlu0 %992, %v742
    %v994 = vpop.permute.xlu0 %993
    %995 = vset.pattern.permute.xlu0 0
    %996 = vperm.xlu0 %995, %v743
    %v997 = vpop.permute.xlu0 %996
    %998 = vset.pattern.permute.xlu0 0
    %999 = vperm.xlu0 %998, %v744
    %v1000 = vpop.permute.xlu0 %999
    %1001 = vset.pattern.permute.xlu0 0
    %1002 = vperm.xlu0 %1001, %v745
    %v1003 = vpop.permute.xlu0 %1002
    %1004 = vset.pattern.permute.xlu0 0
    %1005 = vperm.xlu0 %1004, %v746
    %v1006 = vpop.permute.xlu0 %1005
    %1007 = vset.pattern.permute.xlu0 0
    %1008 = vperm.xlu0 %1007, %v747
    %v1009 = vpop.permute.xlu0 %1008
    %1010 = vset.pattern.permute.xlu0 0
    %1011 = vperm.xlu0 %1010, %v748
    %v1012 = vpop.permute.xlu0 %1011
    %1013 = vset.pattern.permute.xlu0 0
    %1014 = vperm.xlu0 %1013, %v749
    %v1015 = vpop.permute.xlu0 %1014
    %1016 = vset.pattern.permute.xlu0 0
    %1017 = vperm.xlu0 %1016, %v750
    %v1018 = vpop.permute.xlu0 %1017
    %1019 = vset.pattern.permute.xlu0 0
    %1020 = vperm.xlu0 %1019, %v751
    %v1021 = vpop.permute.xlu0 %1020
    %1022 = vset.pattern.permute.xlu0 0
    %1023 = vperm.xlu0 %1022, %v752
    %v1024 = vpop.permute.xlu0 %1023
    %1025 = vset.pattern.permute.xlu0 0
    %1026 = vperm.xlu0 %1025, %v753
    %v1027 = vpop.permute.xlu0 %1026
    %1028 = vset.pattern.permute.xlu0 0
    %1029 = vperm.xlu0 %1028, %v754
    %v1030 = vpop.permute.xlu0 %1029
    %1031 = vset.pattern.permute.xlu0 0
    %1032 = vperm.xlu0 %1031, %v755
    %v1033 = vpop.permute.xlu0 %1032
    %1034 = vset.pattern.permute.xlu0 0
    %1035 = vperm.xlu0 %1034, %v756
    %v1036 = vpop.permute.xlu0 %1035
    %1037 = vset.pattern.permute.xlu0 0
    %1038 = vperm.xlu0 %1037, %v757
    %v1039 = vpop.permute.xlu0 %1038
    %1040 = vset.pattern.permute.xlu0 0
    %1041 = vperm.xlu0 %1040, %v758
    %v1042 = vpop.permute.xlu0 %1041
    %1043 = vset.pattern.permute.xlu0 0
    %1044 = vperm.xlu0 %1043, %v759
    %v1045 = vpop.permute.xlu0 %1044
    %1046 = vset.pattern.permute.xlu0 0
    %1047 = vperm.xlu0 %1046, %v760
    %v1048 = vpop.permute.xlu0 %1047
    %1049 = vset.pattern.permute.xlu0 0
    %1050 = vperm.xlu0 %1049, %v761
    %v1051 = vpop.permute.xlu0 %1050
    %1052 = vset.pattern.permute.xlu0 0
    %1053 = vperm.xlu0 %1052, %v762
    %v1054 = vpop.permute.xlu0 %1053
    %1055 = vset.pattern.permute.xlu0 0
    %1056 = vperm.xlu0 %1055, %v763
    %v1057 = vpop.permute.xlu0 %1056
    %1058 = vset.pattern.permute.xlu0 0
    %1059 = vperm.xlu0 %1058, %v764
    %v1060 = vpop.permute.xlu0 %1059
    %1061 = vset.pattern.permute.xlu0 0
    %1062 = vperm.xlu0 %1061, %v765
    %v1063 = vpop.permute.xlu0 %1062
    %1064 = vset.pattern.permute.xlu0 0
    %1065 = vperm.xlu0 %1064, %v766
    %v1066 = vpop.permute.xlu0 %1065
    %1067 = vset.pattern.permute.xlu0 0
    %1068 = vperm.xlu0 %1067, %v767
    %v1069 = vpop.permute.xlu0 %1068
    %1070 = vset.pattern.permute.xlu0 0
    %1071 = vperm.xlu0 %1070, %v768
    %v1072 = vpop.permute.xlu0 %1071
    %1073 = vset.pattern.permute.xlu0 0
    %1074 = vperm.xlu0 %1073, %v769
    %v1075 = vpop.permute.xlu0 %1074
    %1076 = vset.pattern.permute.xlu0 0
    %1077 = vperm.xlu0 %1076, %v770
    %v1078 = vpop.permute.xlu0 %1077
    %1079 = vset.pattern.permute.xlu0 0
    %1080 = vperm.xlu0 %1079, %v771
    %v1081 = vpop.permute.xlu0 %1080
    %1082 = vset.pattern.permute.xlu0 0
    %1083 = vperm.xlu0 %1082, %v772
    %v1084 = vpop.permute.xlu0 %1083
    %1085 = vset.pattern.permute.xlu0 0
    %1086 = vperm.xlu0 %1085, %v773
    %v1087 = vpop.permute.xlu0 %1086
    %1088 = vset.pattern.permute.xlu0 0
    %1089 = vperm.xlu0 %1088, %v774
    %v1090 = vpop.permute.xlu0 %1089
    %1091 = vset.pattern.permute.xlu0 0
    %1092 = vperm.xlu0 %1091, %v775
    %v1093 = vpop.permute.xlu0 %1092
    %1094 = vset.pattern.permute.xlu0 0
    %1095 = vperm.xlu0 %1094, %v776
    %v1096 = vpop.permute.xlu0 %1095
    %v1097 = vlaneseq
    %v1098 = vshrl.u32 %v1097, 7
    %v1099 = vsub.s32 %v253, %v1098
    %v1100 = vrot.slane %v859, %v1099
    %v1101 = vlaneseq
    %v1102 = vshrl.u32 %v1101, 7
    %v1103 = vsub.s32 %v253, %v1102
    %v1104 = vrot.slane %v862, %v1103
    %v1105 = vlaneseq
    %v1106 = vshrl.u32 %v1105, 7
    %v1107 = vsub.s32 %v253, %v1106
    %v1108 = vrot.slane %v865, %v1107
    %v1109 = vlaneseq
    %v1110 = vshrl.u32 %v1109, 7
    %v1111 = vsub.s32 %v253, %v1110
    %v1112 = vrot.slane %v868, %v1111
    %v1113 = vlaneseq
    %v1114 = vshrl.u32 %v1113, 7
    %v1115 = vsub.s32 %v253, %v1114
    %v1116 = vrot.slane %v871, %v1115
    %v1117 = vlaneseq
    %v1118 = vshrl.u32 %v1117, 7
    %v1119 = vsub.s32 %v253, %v1118
    %v1120 = vrot.slane %v874, %v1119
    %v1121 = vlaneseq
    %v1122 = vshrl.u32 %v1121, 7
    %v1123 = vsub.s32 %v253, %v1122
    %v1124 = vrot.slane %v877, %v1123
    %v1125 = vlaneseq
    %v1126 = vshrl.u32 %v1125, 7
    %v1127 = vsub.s32 %v253, %v1126
    %v1128 = vrot.slane %v880, %v1127
    %v1129 = vlaneseq
    %v1130 = vshrl.u32 %v1129, 7
    %v1131 = vsub.s32 %v253, %v1130
    %v1132 = vrot.slane %v883, %v1131
    %v1133 = vlaneseq
    %v1134 = vshrl.u32 %v1133, 7
    %v1135 = vsub.s32 %v253, %v1134
    %v1136 = vrot.slane %v886, %v1135
    %v1137 = vlaneseq
    %v1138 = vshrl.u32 %v1137, 7
    %v1139 = vsub.s32 %v253, %v1138
    %v1140 = vrot.slane %v889, %v1139
    %v1141 = vlaneseq
    %v1142 = vshrl.u32 %v1141, 7
    %v1143 = vsub.s32 %v253, %v1142
    %v1144 = vrot.slane %v892, %v1143
    %v1145 = vlaneseq
    %v1146 = vshrl.u32 %v1145, 7
    %v1147 = vsub.s32 %v253, %v1146
    %v1148 = vrot.slane %v895, %v1147
    %v1149 = vlaneseq
    %v1150 = vshrl.u32 %v1149, 7
    %v1151 = vsub.s32 %v253, %v1150
    %v1152 = vrot.slane %v898, %v1151
    %v1153 = vlaneseq
    %v1154 = vshrl.u32 %v1153, 7
    %v1155 = vsub.s32 %v253, %v1154
    %v1156 = vrot.slane %v901, %v1155
    %v1157 = vlaneseq
    %v1158 = vshrl.u32 %v1157, 7
    %v1159 = vsub.s32 %v253, %v1158
    %v1160 = vrot.slane %v904, %v1159
    %v1161 = vlaneseq
    %v1162 = vshrl.u32 %v1161, 7
    %v1163 = vsub.s32 %v253, %v1162
    %v1164 = vrot.slane %v907, %v1163
    %v1165 = vlaneseq
    %v1166 = vshrl.u32 %v1165, 7
    %v1167 = vsub.s32 %v253, %v1166
    %v1168 = vrot.slane %v910, %v1167
    %v1169 = vlaneseq
    %v1170 = vshrl.u32 %v1169, 7
    %v1171 = vsub.s32 %v253, %v1170
    %v1172 = vrot.slane %v913, %v1171
    %v1173 = vlaneseq
    %v1174 = vshrl.u32 %v1173, 7
    %v1175 = vsub.s32 %v253, %v1174
    %v1176 = vrot.slane %v916, %v1175
    %v1177 = vlaneseq
    %v1178 = vshrl.u32 %v1177, 7
    %v1179 = vsub.s32 %v253, %v1178
    %v1180 = vrot.slane %v919, %v1179
    %v1181 = vlaneseq
    %v1182 = vshrl.u32 %v1181, 7
    %v1183 = vsub.s32 %v253, %v1182
    %v1184 = vrot.slane %v922, %v1183
    %v1185 = vlaneseq
    %v1186 = vshrl.u32 %v1185, 7
    %v1187 = vsub.s32 %v253, %v1186
    %v1188 = vrot.slane %v925, %v1187
    %v1189 = vlaneseq
    %v1190 = vshrl.u32 %v1189, 7
    %v1191 = vsub.s32 %v253, %v1190
    %v1192 = vrot.slane %v928, %v1191
    %v1193 = vlaneseq
    %v1194 = vshrl.u32 %v1193, 7
    %v1195 = vsub.s32 %v253, %v1194
    %v1196 = vrot.slane %v931, %v1195
    %v1197 = vlaneseq
    %v1198 = vshrl.u32 %v1197, 7
    %v1199 = vsub.s32 %v253, %v1198
    %v1200 = vrot.slane %v934, %v1199
    %v1201 = vlaneseq
    %v1202 = vshrl.u32 %v1201, 7
    %v1203 = vsub.s32 %v253, %v1202
    %v1204 = vrot.slane %v937, %v1203
    %v1205 = vlaneseq
    %v1206 = vshrl.u32 %v1205, 7
    %v1207 = vsub.s32 %v253, %v1206
    %v1208 = vrot.slane %v940, %v1207
    %v1209 = vlaneseq
    %v1210 = vshrl.u32 %v1209, 7
    %v1211 = vsub.s32 %v253, %v1210
    %v1212 = vrot.slane %v943, %v1211
    %v1213 = vlaneseq
    %v1214 = vshrl.u32 %v1213, 7
    %v1215 = vsub.s32 %v253, %v1214
    %v1216 = vrot.slane %v946, %v1215
    %v1217 = vlaneseq
    %v1218 = vshrl.u32 %v1217, 7
    %v1219 = vsub.s32 %v253, %v1218
    %v1220 = vrot.slane %v949, %v1219
    %v1221 = vlaneseq
    %v1222 = vshrl.u32 %v1221, 7
    %v1223 = vsub.s32 %v253, %v1222
    %v1224 = vrot.slane %v952, %v1223
    %v1225 = vlaneseq
    %v1226 = vshrl.u32 %v1225, 7
    %v1227 = vsub.s32 %v253, %v1226
    %v1228 = vrot.slane %v955, %v1227
    %v1229 = vlaneseq
    %v1230 = vshrl.u32 %v1229, 7
    %v1231 = vsub.s32 %v253, %v1230
    %v1232 = vrot.slane %v958, %v1231
    %v1233 = vlaneseq
    %v1234 = vshrl.u32 %v1233, 7
    %v1235 = vsub.s32 %v253, %v1234
    %v1236 = vrot.slane %v961, %v1235
    %v1237 = vlaneseq
    %v1238 = vshrl.u32 %v1237, 7
    %v1239 = vsub.s32 %v253, %v1238
    %v1240 = vrot.slane %v964, %v1239
    %v1241 = vlaneseq
    %v1242 = vshrl.u32 %v1241, 7
    %v1243 = vsub.s32 %v253, %v1242
    %v1244 = vrot.slane %v967, %v1243
    %v1245 = vlaneseq
    %v1246 = vshrl.u32 %v1245, 7
    %v1247 = vsub.s32 %v253, %v1246
    %v1248 = vrot.slane %v970, %v1247
    %v1249 = vlaneseq
    %v1250 = vshrl.u32 %v1249, 7
    %v1251 = vsub.s32 %v253, %v1250
    %v1252 = vrot.slane %v973, %v1251
    %v1253 = vlaneseq
    %v1254 = vshrl.u32 %v1253, 7
    %v1255 = vsub.s32 %v253, %v1254
    %v1256 = vrot.slane %v976, %v1255
    %v1257 = vlaneseq
    %v1258 = vshrl.u32 %v1257, 7
    %v1259 = vsub.s32 %v253, %v1258
    %v1260 = vrot.slane %v979, %v1259
    %v1261 = vlaneseq
    %v1262 = vshrl.u32 %v1261, 7
    %v1263 = vsub.s32 %v253, %v1262
    %v1264 = vrot.slane %v982, %v1263
    %v1265 = vlaneseq
    %v1266 = vshrl.u32 %v1265, 7
    %v1267 = vsub.s32 %v253, %v1266
    %v1268 = vrot.slane %v985, %v1267
    %v1269 = vlaneseq
    %v1270 = vshrl.u32 %v1269, 7
    %v1271 = vsub.s32 %v253, %v1270
    %v1272 = vrot.slane %v988, %v1271
    %v1273 = vlaneseq
    %v1274 = vshrl.u32 %v1273, 7
    %v1275 = vsub.s32 %v253, %v1274
    %v1276 = vrot.slane %v991, %v1275
    %v1277 = vlaneseq
    %v1278 = vshrl.u32 %v1277, 7
    %v1279 = vsub.s32 %v253, %v1278
    %v1280 = vrot.slane %v994, %v1279
    %v1281 = vlaneseq
    %v1282 = vshrl.u32 %v1281, 7
    %v1283 = vsub.s32 %v253, %v1282
    %v1284 = vrot.slane %v997, %v1283
    %v1285 = vlaneseq
    %v1286 = vshrl.u32 %v1285, 7
    %v1287 = vsub.s32 %v253, %v1286
    %v1288 = vrot.slane %v1000, %v1287
    %v1289 = vlaneseq
    %v1290 = vshrl.u32 %v1289, 7
    %v1291 = vsub.s32 %v253, %v1290
    %v1292 = vrot.slane %v1003, %v1291
    %v1293 = vlaneseq
    %v1294 = vshrl.u32 %v1293, 7
    %v1295 = vsub.s32 %v253, %v1294
    %v1296 = vrot.slane %v1006, %v1295
    %v1297 = vlaneseq
    %v1298 = vshrl.u32 %v1297, 7
    %v1299 = vsub.s32 %v253, %v1298
    %v1300 = vrot.slane %v1009, %v1299
    %v1301 = vlaneseq
    %v1302 = vshrl.u32 %v1301, 7
    %v1303 = vsub.s32 %v253, %v1302
    %v1304 = vrot.slane %v1012, %v1303
    %v1305 = vlaneseq
    %v1306 = vshrl.u32 %v1305, 7
    %v1307 = vsub.s32 %v253, %v1306
    %v1308 = vrot.slane %v1015, %v1307
    %v1309 = vlaneseq
    %v1310 = vshrl.u32 %v1309, 7
    %v1311 = vsub.s32 %v253, %v1310
    %v1312 = vrot.slane %v1018, %v1311
    %v1313 = vlaneseq
    %v1314 = vshrl.u32 %v1313, 7
    %v1315 = vsub.s32 %v253, %v1314
    %v1316 = vrot.slane %v1021, %v1315
    %v1317 = vlaneseq
    %v1318 = vshrl.u32 %v1317, 7
    %v1319 = vsub.s32 %v253, %v1318
    %v1320 = vrot.slane %v1024, %v1319
    %v1321 = vlaneseq
    %v1322 = vshrl.u32 %v1321, 7
    %v1323 = vsub.s32 %v253, %v1322
    %v1324 = vrot.slane %v1027, %v1323
    %v1325 = vlaneseq
    %v1326 = vshrl.u32 %v1325, 7
    %v1327 = vsub.s32 %v253, %v1326
    %v1328 = vrot.slane %v1030, %v1327
    %v1329 = vlaneseq
    %v1330 = vshrl.u32 %v1329, 7
    %v1331 = vsub.s32 %v253, %v1330
    %v1332 = vrot.slane %v1033, %v1331
    %v1333 = vlaneseq
    %v1334 = vshrl.u32 %v1333, 7
    %v1335 = vsub.s32 %v253, %v1334
    %v1336 = vrot.slane %v1036, %v1335
    %v1337 = vlaneseq
    %v1338 = vshrl.u32 %v1337, 7
    %v1339 = vsub.s32 %v253, %v1338
    %v1340 = vrot.slane %v1039, %v1339
    %v1341 = vlaneseq
    %v1342 = vshrl.u32 %v1341, 7
    %v1343 = vsub.s32 %v253, %v1342
    %v1344 = vrot.slane %v1042, %v1343
    %v1345 = vlaneseq
    %v1346 = vshrl.u32 %v1345, 7
    %v1347 = vsub.s32 %v253, %v1346
    %v1348 = vrot.slane %v1045, %v1347
    %v1349 = vlaneseq
    %v1350 = vshrl.u32 %v1349, 7
    %v1351 = vsub.s32 %v253, %v1350
    %v1352 = vrot.slane %v1048, %v1351
    %v1353 = vlaneseq
    %v1354 = vshrl.u32 %v1353, 7
    %v1355 = vsub.s32 %v253, %v1354
    %v1356 = vrot.slane %v1051, %v1355
    %v1357 = vlaneseq
    %v1358 = vshrl.u32 %v1357, 7
    %v1359 = vsub.s32 %v253, %v1358
    %v1360 = vrot.slane %v1054, %v1359
    %v1361 = vlaneseq
    %v1362 = vshrl.u32 %v1361, 7
    %v1363 = vsub.s32 %v253, %v1362
    %v1364 = vrot.slane %v1057, %v1363
    %v1365 = vlaneseq
    %v1366 = vshrl.u32 %v1365, 7
    %v1367 = vsub.s32 %v253, %v1366
    %v1368 = vrot.slane %v1060, %v1367
    %v1369 = vlaneseq
    %v1370 = vshrl.u32 %v1369, 7
    %v1371 = vsub.s32 %v253, %v1370
    %v1372 = vrot.slane %v1063, %v1371
    %v1373 = vlaneseq
    %v1374 = vshrl.u32 %v1373, 7
    %v1375 = vsub.s32 %v253, %v1374
    %v1376 = vrot.slane %v1066, %v1375
    %v1377 = vlaneseq
    %v1378 = vshrl.u32 %v1377, 7
    %v1379 = vsub.s32 %v253, %v1378
    %v1380 = vrot.slane %v1069, %v1379
    %v1381 = vlaneseq
    %v1382 = vshrl.u32 %v1381, 7
    %v1383 = vsub.s32 %v253, %v1382
    %v1384 = vrot.slane %v1072, %v1383
    %v1385 = vlaneseq
    %v1386 = vshrl.u32 %v1385, 7
    %v1387 = vsub.s32 %v253, %v1386
    %v1388 = vrot.slane %v1075, %v1387
    %v1389 = vlaneseq
    %v1390 = vshrl.u32 %v1389, 7
    %v1391 = vsub.s32 %v253, %v1390
    %v1392 = vrot.slane %v1078, %v1391
    %v1393 = vlaneseq
    %v1394 = vshrl.u32 %v1393, 7
    %v1395 = vsub.s32 %v253, %v1394
    %v1396 = vrot.slane %v1081, %v1395
    %v1397 = vlaneseq
    %v1398 = vshrl.u32 %v1397, 7
    %v1399 = vsub.s32 %v253, %v1398
    %v1400 = vrot.slane %v1084, %v1399
    %v1401 = vlaneseq
    %v1402 = vshrl.u32 %v1401, 7
    %v1403 = vsub.s32 %v253, %v1402
    %v1404 = vrot.slane %v1087, %v1403
    %v1405 = vlaneseq
    %v1406 = vshrl.u32 %v1405, 7
    %v1407 = vsub.s32 %v253, %v1406
    %v1408 = vrot.slane %v1090, %v1407
    %v1409 = vlaneseq
    %v1410 = vshrl.u32 %v1409, 7
    %v1411 = vsub.s32 %v253, %v1410
    %v1412 = vrot.slane %v1093, %v1411
    %v1413 = vlaneseq
    %v1414 = vshrl.u32 %v1413, 7
    %v1415 = vsub.s32 %v253, %v1414
    %v1416 = vrot.slane %v1096, %v1415
    %v1417 = vsel %vm358, %v1104, %v1100
    %vm1418 = vcmask 1042434
    %v1419 = vsel %vm1418, %v1108, %v1417
    %vm1420 = vcmask 1043459
    %v1421 = vsel %vm1420, %v1112, %v1419
    %vm1422 = vcmask 1044484
    %v1423 = vsel %vm1422, %v1116, %v1421
    %vm1424 = vcmask 1045509
    %v1425 = vsel %vm1424, %v1120, %v1423
    %vm1426 = vcmask 1046534
    %v1427 = vsel %vm1426, %v1124, %v1425
    %vm1428 = vcmask 1047559
    %v1429 = vsel %vm1428, %v1128, %v1427
    %v1430 = vsel %vm358, %v1136, %v1132
    %v1431 = vsel %vm1418, %v1140, %v1430
    %v1432 = vsel %vm1420, %v1144, %v1431
    %v1433 = vsel %vm1422, %v1148, %v1432
    %v1434 = vsel %vm1424, %v1152, %v1433
    %v1435 = vsel %vm1426, %v1156, %v1434
    %v1436 = vsel %vm1428, %v1160, %v1435
    %v1437 = vsel %vm358, %v1168, %v1164
    %v1438 = vsel %vm1418, %v1172, %v1437
    %v1439 = vsel %vm1420, %v1176, %v1438
    %v1440 = vsel %vm1422, %v1180, %v1439
    %v1441 = vsel %vm1424, %v1184, %v1440
    %v1442 = vsel %vm1426, %v1188, %v1441
    %v1443 = vsel %vm1428, %v1192, %v1442
    %v1444 = vsel %vm358, %v1200, %v1196
    %v1445 = vsel %vm1418, %v1204, %v1444
    %v1446 = vsel %vm1420, %v1208, %v1445
    %v1447 = vsel %vm1422, %v1212, %v1446
    %v1448 = vsel %vm1424, %v1216, %v1447
    %v1449 = vsel %vm1426, %v1220, %v1448
    %v1450 = vsel %vm1428, %v1224, %v1449
    %v1451 = vsel %vm358, %v1232, %v1228
    %v1452 = vsel %vm1418, %v1236, %v1451
    %v1453 = vsel %vm1420, %v1240, %v1452
    %v1454 = vsel %vm1422, %v1244, %v1453
    %v1455 = vsel %vm1424, %v1248, %v1454
    %v1456 = vsel %vm1426, %v1252, %v1455
    %v1457 = vsel %vm1428, %v1256, %v1456
    %v1458 = vsel %vm358, %v1264, %v1260
    %v1459 = vsel %vm1418, %v1268, %v1458
    %v1460 = vsel %vm1420, %v1272, %v1459
    %v1461 = vsel %vm1422, %v1276, %v1460
    %v1462 = vsel %vm1424, %v1280, %v1461
    %v1463 = vsel %vm1426, %v1284, %v1462
    %v1464 = vsel %vm1428, %v1288, %v1463
    %v1465 = vsel %vm358, %v1296, %v1292
    %v1466 = vsel %vm1418, %v1300, %v1465
    %v1467 = vsel %vm1420, %v1304, %v1466
    %v1468 = vsel %vm1422, %v1308, %v1467
    %v1469 = vsel %vm1424, %v1312, %v1468
    %v1470 = vsel %vm1426, %v1316, %v1469
    %v1471 = vsel %vm1428, %v1320, %v1470
    %v1472 = vsel %vm358, %v1328, %v1324
    %v1473 = vsel %vm1418, %v1332, %v1472
    %v1474 = vsel %vm1420, %v1336, %v1473
    %v1475 = vsel %vm1422, %v1340, %v1474
    %v1476 = vsel %vm1424, %v1344, %v1475
    %v1477 = vsel %vm1426, %v1348, %v1476
    %v1478 = vsel %vm1428, %v1352, %v1477
    %v1479 = vsel %vm358, %v1360, %v1356
    %v1480 = vsel %vm1418, %v1364, %v1479
    %v1481 = vsel %vm1420, %v1368, %v1480
    %v1482 = vsel %vm1422, %v1372, %v1481
    %v1483 = vsel %vm1424, %v1376, %v1482
    %v1484 = vsel %vm1426, %v1380, %v1483
    %v1485 = vsel %vm1428, %v1384, %v1484
    %v1486 = vsel %vm358, %v1392, %v1388
    %v1487 = vsel %vm1418, %v1396, %v1486
    %v1488 = vsel %vm1420, %v1400, %v1487
    %v1489 = vsel %vm1422, %v1404, %v1488
    %v1490 = vsel %vm1424, %v1408, %v1489
    %v1491 = vsel %vm1426, %v1412, %v1490
    %v1492 = vsel %vm1428, %v1416, %v1491
    %vm1503 = vcmask 15360
    %v1504 = vsel %vm1503, %v1429, 0.0
    %1505 = vadd.xlane.f32.xlu0 %v1504
    %v1506 = vpop.xlane.xlu0 %1505
    %v1507 = vsel %vm1503, %v1436, 0.0
    %1508 = vadd.xlane.f32.xlu0 %v1507
    %v1509 = vpop.xlane.xlu0 %1508
    %v1510 = vsel %vm1503, %v1443, 0.0
    %1511 = vadd.xlane.f32.xlu0 %v1510
    %v1512 = vpop.xlane.xlu0 %1511
    %v1513 = vsel %vm1503, %v1450, 0.0
    %1514 = vadd.xlane.f32.xlu0 %v1513
    %v1515 = vpop.xlane.xlu0 %1514
    %v1516 = vsel %vm1503, %v1457, 0.0
    %1517 = vadd.xlane.f32.xlu0 %v1516
    %v1518 = vpop.xlane.xlu0 %1517
    %v1519 = vsel %vm1503, %v1464, 0.0
    %1520 = vadd.xlane.f32.xlu0 %v1519
    %v1521 = vpop.xlane.xlu0 %1520
    %v1522 = vsel %vm1503, %v1471, 0.0
    %1523 = vadd.xlane.f32.xlu0 %v1522
    %v1524 = vpop.xlane.xlu0 %1523
    %v1525 = vsel %vm1503, %v1478, 0.0
    %1526 = vadd.xlane.f32.xlu0 %v1525
    %v1527 = vpop.xlane.xlu0 %1526
    %v1528 = vsel %vm1503, %v1485, 0.0
    %1529 = vadd.xlane.f32.xlu0 %v1528
    %v1530 = vpop.xlane.xlu0 %1529
    %v1531 = vsel %vm1503, %v1492, 0.0
    %1532 = vadd.xlane.f32.xlu0 %v1531
    %v1533 = vpop.xlane.xlu0 %1532
    %v1534 = vxor.u32 %v1506, 2147483648
    %v1535 = vxor.u32 %v1509, 2147483648
    %v1536 = vxor.u32 %v1512, 2147483648
    %v1537 = vxor.u32 %v1515, 2147483648
    %v1538 = vxor.u32 %v1518, 2147483648
    %v1539 = vxor.u32 %v1521, 2147483648
    %v1540 = vxor.u32 %v1524, 2147483648
    %v1541 = vxor.u32 %v1527, 2147483648
    %v1542 = vxor.u32 %v1530, 2147483648
    %v1543 = vxor.u32 %v1533, 2147483648
    %v1544 = vmul.f32 %v1534, 1.442695
    %v1545 = vpow.pop %v1544
    %v1546 = vmul.f32 %v1535, 1.442695
    %v1547 = vpow.pop %v1546
    %v1548 = vmul.f32 %v1536, 1.442695
    %v1549 = vpow.pop %v1548
    %v1550 = vmul.f32 %v1537, 1.442695
    %v1551 = vpow.pop %v1550
    %v1552 = vmul.f32 %v1538, 1.442695
    %v1553 = vpow.pop %v1552
    %v1554 = vmul.f32 %v1539, 1.442695
    %v1555 = vpow.pop %v1554
    %v1556 = vmul.f32 %v1540, 1.442695
    %v1557 = vpow.pop %v1556
    %v1558 = vmul.f32 %v1541, 1.442695
    %v1559 = vpow.pop %v1558
    %v1560 = vmul.f32 %v1542, 1.442695
    %v1561 = vpow.pop %v1560
    %v1562 = vmul.f32 %v1543, 1.442695
    %v1563 = vpow.pop %v1562
    %v1564 = vadd.f32 %v1545, 1.0
    %v1565 = vadd.f32 %v1547, 1.0
    %v1566 = vadd.f32 %v1549, 1.0
    %v1567 = vadd.f32 %v1551, 1.0
    %v1568 = vadd.f32 %v1553, 1.0
    %v1569 = vadd.f32 %v1555, 1.0
    %v1570 = vadd.f32 %v1557, 1.0
    %v1571 = vadd.f32 %v1559, 1.0
    %v1572 = vadd.f32 %v1561, 1.0
    %v1573 = vadd.f32 %v1563, 1.0
    %v1574 = vrcp.pop %v1564
    %v1575 = vmul.f32 1.0, %v1574
    %v1576 = vrcp.pop %v1565
    %v1577 = vmul.f32 1.0, %v1576
    %v1578 = vrcp.pop %v1566
    %v1579 = vmul.f32 1.0, %v1578
    %v1580 = vrcp.pop %v1567
    %v1581 = vmul.f32 1.0, %v1580
    %v1582 = vrcp.pop %v1568
    %v1583 = vmul.f32 1.0, %v1582
    %v1584 = vrcp.pop %v1569
    %v1585 = vmul.f32 1.0, %v1584
    %v1586 = vrcp.pop %v1570
    %v1587 = vmul.f32 1.0, %v1586
    %v1588 = vrcp.pop %v1571
    %v1589 = vmul.f32 1.0, %v1588
    %v1590 = vrcp.pop %v1572
    %v1591 = vmul.f32 1.0, %v1590
    %v1592 = vrcp.pop %v1573
    %v1593 = vmul.f32 1.0, %v1592
    %v1594 = vmul.f32 %v29, %v1575
    %v1595 = vmul.f32 %v30, %v1575
    %v1596 = vmul.f32 %v31, %v1577
    %v1597 = vmul.f32 %v32, %v1577
    %v1598 = vmul.f32 %v33, %v1579
    %v1599 = vmul.f32 %v34, %v1579
    %v1600 = vmul.f32 %v35, %v1581
    %v1601 = vmul.f32 %v36, %v1581
    %v1602 = vmul.f32 %v37, %v1583
    %v1603 = vmul.f32 %v38, %v1583
    %v1604 = vmul.f32 %v39, %v1585
    %v1605 = vmul.f32 %v40, %v1585
    %v1606 = vmul.f32 %v41, %v1587
    %v1607 = vmul.f32 %v42, %v1587
    %v1608 = vmul.f32 %v43, %v1589
    %v1609 = vmul.f32 %v44, %v1589
    %v1610 = vmul.f32 %v45, %v1591
    %v1611 = vmul.f32 %v46, %v1591
    %v1612 = vmul.f32 %v47, %v1593
    %v1613 = vmul.f32 %v48, %v1593
    %1614 = vst [vmem:[#allocation5] sm:$0xff] %v1594
    %1615 = vst [vmem:[#allocation5 + $0x8] sm:$0xff] %v1595
    %1616 = vst [vmem:[#allocation5 + $0x10] sm:$0xff] %v1596
    %1617 = vst [vmem:[#allocation5 + $0x18] sm:$0xff] %v1597
    %1618 = vst [vmem:[#allocation5 + $0x20] sm:$0xff] %v1598
    %1619 = vst [vmem:[#allocation5 + $0x28] sm:$0xff] %v1599
    %1620 = vst [vmem:[#allocation5 + $0x30] sm:$0xff] %v1600
    %1621 = vst [vmem:[#allocation5 + $0x38] sm:$0xff] %v1601
    %1622 = vst [vmem:[#allocation5 + $0x40] sm:$0xff] %v1602
    %1623 = vst [vmem:[#allocation5 + $0x48] sm:$0xff] %v1603
    %1624 = vst [vmem:[#allocation5 + $0x50] sm:$0xff] %v1604
    %1625 = vst [vmem:[#allocation5 + $0x58] sm:$0xff] %v1605
    %1626 = vst [vmem:[#allocation5 + $0x60] sm:$0xff] %v1606
    %1627 = vst [vmem:[#allocation5 + $0x68] sm:$0xff] %v1607
    %1628 = vst [vmem:[#allocation5 + $0x70] sm:$0xff] %v1608
    %1629 = vst [vmem:[#allocation5 + $0x78] sm:$0xff] %v1609
    %1630 = vst [vmem:[#allocation5 + $0x80] sm:$0xff] %v1610
    %1631 = vst [vmem:[#allocation5 + $0x88] sm:$0xff] %v1611
    %1632 = vst [vmem:[#allocation5 + $0x90] sm:$0xff] %v1612
    %1633 = vst [vmem:[#allocation5 + $0x98] sm:$0xff] %v1613
    // Predicated region
    $region18: #{tpu_custom_call.1} parent=1 // pred_check
      _
    $region19: #{tpu_custom_call.1} parent=1 // pred_check_branch
      %1635 = sbr.rel (0) target = $region21
    $region20: #{tpu_custom_call.1} parent=1 // pred_region
      %s1637 = ssub.s32 2560, 2560
      %1638 = vsyncadd [#allocation4], %s1637
      %s1639 = sshll.u32 [#allocation5], 4
      %s1640 = int_to_ptr.vmem [resolvable:$true] %s1639
      %1645 = dma.vmem_to_hbm [thread:$0]  %s1640, 2560, %s3, [#allocation4], 256, 256, 16
    $region21: #{tpu_custom_call.1} parent=1 // pred_fallthru
      _
    // Predicated region
    $region22: #{tpu_custom_call.1} parent=1 // pred_check
      _
    $region23: #{tpu_custom_call.1} parent=1 // pred_check_branch
      %1647 = sbr.rel (0) target = $region25
    $region24: #{tpu_custom_call.1} parent=1 // pred_region
      %1648 = dma.done [#allocation4], 2560
    $region25: #{tpu_custom_call.1} parent=1 // pred_fallthru
      _
    %1649 = vsyncpa [#allocation3], 1
    %1650 = vsyncpa [#allocation4], 1

</llo_original>
